<compile_context>
chip_gen: v7x
topology: tpu7x:2x2x1
jax: 0.10.0
libtpu: 0.0.40
codegen_flags: <defaults>
</compile_context>

<pallas_src>
import functools

import jax
import jax.numpy as jnp
import numpy as np
from jax.experimental import pallas as pl
from jax.experimental.pallas import tpu as pltpu

LATENT_DIM = 32
OUTPUT_DIM = 4          # len(FEATURES)
NUM_CLASSES = 3
INIT_TEMPERATURE = 1.0
LN_EPS = 1e-5           # PyTorch nn.LayerNorm default eps


def _layernorm(x, gamma, beta):
    # PyTorch LayerNorm over the last dim (biased variance, eps inside rsqrt),
    # computed with two INDEPENDENT reductions (sum, sum of squares) so the
    # two XLU reductions are not serially dependent.
    n = x.shape[-1]
    inv_n = 1.0 / n
    s1 = jnp.sum(x, axis=-1, keepdims=True)
    s2 = jnp.sum(x * x, axis=-1, keepdims=True)
    mean = s1 * inv_n
    var = s2 * inv_n - mean * mean
    return (x - mean) * jax.lax.rsqrt(var + LN_EPS) * gamma + beta


def generator_fused_kernel(
    tau_ref,                           # SMEM scalar (1,)
    z_ref, w_ref, vec_ref,             # z, packed 32x32 weights, packed vectors
    w_out_ref, b_out_ref,              # output head (class-major columns)
    noise_ref,                         # (B, 12) Gumbel noise, class-major
    out_ref,                           # (B, NUM_CLASSES*OUTPUT_DIM) lane-dense
    *, hard,
):
    """fc_in -> ResBlock(LN,ReLU,Lin,LN,ReLU,Lin)+skip x2 -> fc_out -> gumbel-softmax.

    Packed layouts (static value slices, zero-cost):
      w_ref   (5*D, D): [w_in, w1a, w1b, w2a, w2b]
      vec_ref (13,  D): [b_in,
                         g11, be11, b1a, g12, be12, b1b,
                         g21, be21, b2a, g22, be22, b2b]
    """
    D = LATENT_DIM

    # Load the parameter slabs once; slice the values (not the refs).
    w_all = w_ref[...].astype(jnp.bfloat16)     # bf16 MXU inputs (f32 accumulate)
    vecs = vec_ref[...]                         # f32, ~2 vregs

    def W(i):                                   # (D, D) weight i, bf16
        return w_all[i * D:(i + 1) * D, :]

    def V(i):                                   # (1, D) vector i, f32
        return vecs[i:i + 1, :]

    z = z_ref[...]

    # fc_in
    x = jnp.dot(z.astype(jnp.bfloat16), W(0),
                preferred_element_type=jnp.float32) + V(0)

    def res_block(x, w_a, w_b, vbase):
        h = _layernorm(x, V(vbase), V(vbase + 1))
        h = jnp.maximum(h, 0.0)
        h = jnp.dot(h.astype(jnp.bfloat16), w_a,
                    preferred_element_type=jnp.float32) + V(vbase + 2)
        h = _layernorm(h, V(vbase + 3), V(vbase + 4))
        h = jnp.maximum(h, 0.0)
        h = jnp.dot(h.astype(jnp.bfloat16), w_b,
                    preferred_element_type=jnp.float32) + V(vbase + 5)
        return h + x               # skip = Identity (in_dim == out_dim)

    x = res_block(x, W(1), W(2), 1)
    x = res_block(x, W(3), W(4), 7)

    # fc_out -> logits, class-major columns: [c0_f0..f3 | c1_f0..f3 | c2_f0..f3]
    logits = (jnp.dot(x.astype(jnp.bfloat16), w_out_ref[...].astype(jnp.bfloat16),
                      preferred_element_type=jnp.float32)
              + b_out_ref[...])

    inv_tau = 1.0 / tau_ref[0]
    y = (logits + noise_ref[...]) * inv_tau

    # Per-group softmax over the class axis, which (class-major) is 3 blocks of
    # width OUTPUT_DIM=4 — static 4-wide slices, pairwise VPU max/compares, and
    # one concatenated lane-dense store at the end.
    cols = [y[:, k * OUTPUT_DIM:(k + 1) * OUTPUT_DIM] for k in range(NUM_CLASSES)]

    if hard:
        # TODO(synk): straight-through estimator (y_hard - stop_grad(y_soft)
        # + y_soft) is gradient-only; forward value (one-hot of argmax, first
        # index on ties) matches PyTorch hard=True. No autodiff path here.
        parts = []
        for k in range(NUM_CLASSES):
            sel = None
            for j in range(NUM_CLASSES):
                if j == k:
                    continue
                cmp = (cols[k] > cols[j]) if j < k else (cols[k] >= cols[j])
                sel = cmp if sel is None else jnp.logical_and(sel, cmp)
            parts.append(jnp.where(sel, 1.0, 0.0).astype(jnp.float32))
        out_ref[...] = jnp.concatenate(parts, axis=-1)
    else:
        m = cols[0]
        for c in cols[1:]:
            m = jnp.maximum(m, c)
        es = [jnp.exp(c - m) for c in cols]
        denom = es[0]
        for e in es[1:]:
            denom = denom + e
        inv = 1.0 / denom          # exact (approx reciprocal would loosen 1e-5 tol)
        out_ref[...] = jnp.concatenate([e * inv for e in es], axis=-1)


def init_generator_params(key, latent_dim=LATENT_DIM,
                          output_dim=OUTPUT_DIM, num_classes=NUM_CLASSES):
    """Deterministic synthetic params (PyTorch-Linear-style uniform init),
    packed into 4 arrays so the kernel needs only 4 parameter DMAs.
    fc_out columns are permuted to class-major order for the kernel."""
    def linear(key, d_in, d_out):
        k1, k2 = jax.random.split(key)
        bound = 1.0 / np.sqrt(d_in)
        w = jax.random.uniform(k1, (d_in, d_out), jnp.float32, -bound, bound)
        b = jax.random.uniform(k2, (1, d_out), jnp.float32, -bound, bound)
        return w, b

    keys = jax.random.split(key, 6)
    w_in, b_in = linear(keys[0], latent_dim, latent_dim)
    w1a, b1a = linear(keys[1], latent_dim, latent_dim)
    w1b, b1b = linear(keys[2], latent_dim, latent_dim)
    w2a, b2a = linear(keys[3], latent_dim, latent_dim)
    w2b, b2b = linear(keys[4], latent_dim, latent_dim)
    w_out, b_out = linear(keys[5], latent_dim, output_dim * num_classes)

    # Permute fc_out columns feature-major -> class-major (kernel layout).
    perm = np.arange(output_dim * num_classes).reshape(
        output_dim, num_classes).T.reshape(-1)
    w_out = w_out[:, perm]
    b_out = b_out[:, perm]

    ones = jnp.ones((1, latent_dim), jnp.float32)    # LayerNorm gamma
    zeros = jnp.zeros((1, latent_dim), jnp.float32)  # LayerNorm beta

    w_slab = jnp.concatenate([w_in, w1a, w1b, w2a, w2b], axis=0)      # (5*D, D)
    vec_slab = jnp.concatenate(
        [b_in,
         ones, zeros, b1a, ones, zeros, b1b,     # block1: g1, be1, b_a, g2, be2, b_b
         ones, zeros, b2a, ones, zeros, b2b],    # block2
        axis=0)                                                        # (13, D)
    return w_slab, vec_slab, w_out, b_out


@functools.partial(jax.jit, static_argnames=("hard",))
def generator_forward(z, params, key, temperature=INIT_TEMPERATURE, hard=False):
    B = z.shape[0]
    d_out = OUTPUT_DIM * NUM_CLASSES
    w_slab, vec_slab, w_out, b_out = params

    tau = jnp.asarray(temperature, dtype=jnp.float32).reshape(1)
    # Gumbel noise generated outside the kernel (the in-kernel HW PRNG has no
    # portable lowering); iid, so the class-major layout needs no permutation.
    gumbel = jax.random.gumbel(key, (B, d_out), dtype=jnp.float32)

    smem = pl.BlockSpec(memory_space=pltpu.MemorySpace.SMEM)
    vmem = pl.BlockSpec(memory_space=pltpu.MemorySpace.VMEM)

    # Single fused kernel, whole (tiny) problem in one grid step.
    # TODO(synk): for production batch sizes add a batch grid
    # (grid=(pl.cdiv(B, TB),), params with constant index_maps,
    # dimension_semantics=("parallel",), TB sized against v7x's 64 MiB VMEM).
    out2d = pl.pallas_call(
        functools.partial(generator_fused_kernel, hard=hard),
        out_shape=jax.ShapeDtypeStruct((B, d_out), jnp.float32),
        in_specs=[smem, vmem, vmem, vmem, vmem, vmem, vmem],
        out_specs=vmem,
    )(tau, z, w_slab, vec_slab, w_out, b_out, gumbel)

    # Class-major (B, 3*4) -> (B, OUTPUT_DIM, NUM_CLASSES)
    return out2d.reshape(B, NUM_CLASSES, OUTPUT_DIM).transpose(0, 2, 1)


if __name__ == "__main__":
    key = jax.random.PRNGKey(0)
    k_params, k_z, k_noise = jax.random.split(key, 3)

    B = 8
    z = jax.random.normal(k_z, (B, LATENT_DIM), dtype=jnp.float32)
    params = init_generator_params(k_params)

    # soft path
    out = generator_forward(z, params, k_noise, INIT_TEMPERATURE, hard=False)
    out = jax.block_until_ready(out)
    assert out.shape == (B, OUTPUT_DIM, NUM_CLASSES)
    np.testing.assert_allclose(np.asarray(out).sum(-1), 1.0, rtol=1e-5, atol=1e-5)

    # annealed temperature: same compiled executable (tau is a runtime scalar)
    out_t = jax.block_until_ready(
        generator_forward(z, params, k_noise, 0.5, hard=False))
    np.testing.assert_allclose(np.asarray(out_t).sum(-1), 1.0, rtol=1e-5, atol=1e-5)

    # hard path: rows are exact one-hots
    out_hard = jax.block_until_ready(
        generator_forward(z, params, k_noise, INIT_TEMPERATURE, hard=True))
    np.testing.assert_allclose(np.asarray(out_hard).sum(-1), 1.0, rtol=1e-6, atol=1e-6)
    assert set(np.unique(np.asarray(out_hard))) <= {0.0, 1.0}

    print("KERNEL_OK")
</pallas_src>

<mosaic_0001>
module attributes {stable_mosaic.version = 11 : i64} {
  func.func @generator_fused_kernel(%arg0: memref<1xf32, #tpu.memory_space<smem>>, %arg1: memref<8x32xf32, #tpu.memory_space<vmem>>, %arg2: memref<160x32xf32, #tpu.memory_space<vmem>>, %arg3: memref<13x32xf32, #tpu.memory_space<vmem>>, %arg4: memref<32x12xf32, #tpu.memory_space<vmem>>, %arg5: memref<1x12xf32, #tpu.memory_space<vmem>>, %arg6: memref<8x12xf32, #tpu.memory_space<vmem>>, %arg7: memref<8x12xf32, #tpu.memory_space<vmem>>) attributes {dimension_semantics = [], scalar_prefetch = 0 : i64, scratch_operands = 0 : i64, tpu.core_type = #tpu.core_type<tc>} {
    %c0 = arith.constant 0 : index
    %c0_0 = arith.constant 0 : index
    %0 = vector.load %arg2[%c0, %c0_0] : memref<160x32xf32, #tpu.memory_space<vmem>>, vector<160x32xf32>
    %1 = arith.truncf %0 : vector<160x32xf32> to vector<160x32xbf16>
    %c0_1 = arith.constant 0 : index
    %c0_2 = arith.constant 0 : index
    %2 = vector.load %arg3[%c0_1, %c0_2] : memref<13x32xf32, #tpu.memory_space<vmem>>, vector<13x32xf32>
    %c0_3 = arith.constant 0 : index
    %c0_4 = arith.constant 0 : index
    %3 = vector.load %arg1[%c0_3, %c0_4] : memref<8x32xf32, #tpu.memory_space<vmem>>, vector<8x32xf32>
    %4 = arith.truncf %3 : vector<8x32xf32> to vector<8x32xbf16>
    %5 = vector.extract_strided_slice %1 {offsets = [0, 0], sizes = [32, 32], strides = [1, 1]} : vector<160x32xbf16> to vector<32x32xbf16>
    %cst = arith.constant dense<0.000000e+00> : vector<8x32xf32>
    %6 = tpu.matmul %4, %5, %cst {dimension_numbers = #tpu.dot_dimension_numbers<[1], [0], [0], [1], [0, 0, 1, 1], [], []>} : vector<8x32xbf16>, vector<32x32xbf16>, vector<8x32xf32> -> vector<8x32xf32>
    %7 = vector.extract_strided_slice %2 {offsets = [0, 0], sizes = [1, 32], strides = [1, 1]} : vector<13x32xf32> to vector<1x32xf32>
    %8 = vector.broadcast %7 : vector<1x32xf32> to vector<8x32xf32>
    %9 = arith.addf %6, %8 : vector<8x32xf32>
    %10 = vector.extract_strided_slice %1 {offsets = [32, 0], sizes = [32, 32], strides = [1, 1]} : vector<160x32xbf16> to vector<32x32xbf16>
    %11 = vector.extract_strided_slice %1 {offsets = [64, 0], sizes = [32, 32], strides = [1, 1]} : vector<160x32xbf16> to vector<32x32xbf16>
    %12 = vector.extract_strided_slice %2 {offsets = [1, 0], sizes = [1, 32], strides = [1, 1]} : vector<13x32xf32> to vector<1x32xf32>
    %13 = vector.extract_strided_slice %2 {offsets = [2, 0], sizes = [1, 32], strides = [1, 1]} : vector<13x32xf32> to vector<1x32xf32>
    %cst_5 = arith.constant dense<0.000000e+00> : vector<8xf32>
    %14 = vector.multi_reduction <add>, %9, %cst_5 [1] : vector<8x32xf32> to vector<8xf32>
    %15 = vector.shape_cast %14 : vector<8xf32> to vector<8x1xf32>
    %16 = arith.mulf %9, %9 : vector<8x32xf32>
    %cst_6 = arith.constant dense<0.000000e+00> : vector<8xf32>
    %17 = vector.multi_reduction <add>, %16, %cst_6 [1] : vector<8x32xf32> to vector<8xf32>
    %18 = vector.shape_cast %17 : vector<8xf32> to vector<8x1xf32>
    %cst_7 = arith.constant 3.125000e-02 : f32
    %19 = vector.broadcast %cst_7 : f32 to vector<8x1xf32>
    %20 = arith.mulf %15, %19 : vector<8x1xf32>
    %cst_8 = arith.constant 3.125000e-02 : f32
    %21 = vector.broadcast %cst_8 : f32 to vector<8x1xf32>
    %22 = arith.mulf %18, %21 : vector<8x1xf32>
    %23 = arith.mulf %20, %20 : vector<8x1xf32>
    %24 = arith.subf %22, %23 : vector<8x1xf32>
    %25 = vector.broadcast %20 : vector<8x1xf32> to vector<8x32xf32>
    %26 = arith.subf %9, %25 : vector<8x32xf32>
    %cst_9 = arith.constant 9.99999974E-6 : f32
    %27 = vector.broadcast %cst_9 : f32 to vector<8x1xf32>
    %28 = arith.addf %24, %27 : vector<8x1xf32>
    %29 = math.rsqrt %28 : vector<8x1xf32>
    %30 = vector.broadcast %29 : vector<8x1xf32> to vector<8x32xf32>
    %31 = arith.mulf %26, %30 : vector<8x32xf32>
    %32 = vector.broadcast %12 : vector<1x32xf32> to vector<8x32xf32>
    %33 = arith.mulf %31, %32 : vector<8x32xf32>
    %34 = vector.broadcast %13 : vector<1x32xf32> to vector<8x32xf32>
    %35 = arith.addf %33, %34 : vector<8x32xf32>
    %cst_10 = arith.constant 0.000000e+00 : f32
    %36 = vector.broadcast %cst_10 : f32 to vector<8x32xf32>
    %37 = arith.maximumf %35, %36 : vector<8x32xf32>
    %38 = arith.truncf %37 : vector<8x32xf32> to vector<8x32xbf16>
    %cst_11 = arith.constant dense<0.000000e+00> : vector<8x32xf32>
    %39 = tpu.matmul %38, %10, %cst_11 {dimension_numbers = #tpu.dot_dimension_numbers<[1], [0], [0], [1], [0, 0, 1, 1], [], []>} : vector<8x32xbf16>, vector<32x32xbf16>, vector<8x32xf32> -> vector<8x32xf32>
    %40 = vector.extract_strided_slice %2 {offsets = [3, 0], sizes = [1, 32], strides = [1, 1]} : vector<13x32xf32> to vector<1x32xf32>
    %41 = vector.broadcast %40 : vector<1x32xf32> to vector<8x32xf32>
    %42 = arith.addf %39, %41 : vector<8x32xf32>
    %43 = vector.extract_strided_slice %2 {offsets = [4, 0], sizes = [1, 32], strides = [1, 1]} : vector<13x32xf32> to vector<1x32xf32>
    %44 = vector.extract_strided_slice %2 {offsets = [5, 0], sizes = [1, 32], strides = [1, 1]} : vector<13x32xf32> to vector<1x32xf32>
    %cst_12 = arith.constant dense<0.000000e+00> : vector<8xf32>
    %45 = vector.multi_reduction <add>, %42, %cst_12 [1] : vector<8x32xf32> to vector<8xf32>
    %46 = vector.shape_cast %45 : vector<8xf32> to vector<8x1xf32>
    %47 = arith.mulf %42, %42 : vector<8x32xf32>
    %cst_13 = arith.constant dense<0.000000e+00> : vector<8xf32>
    %48 = vector.multi_reduction <add>, %47, %cst_13 [1] : vector<8x32xf32> to vector<8xf32>
    %49 = vector.shape_cast %48 : vector<8xf32> to vector<8x1xf32>
    %cst_14 = arith.constant 3.125000e-02 : f32
    %50 = vector.broadcast %cst_14 : f32 to vector<8x1xf32>
    %51 = arith.mulf %46, %50 : vector<8x1xf32>
    %cst_15 = arith.constant 3.125000e-02 : f32
    %52 = vector.broadcast %cst_15 : f32 to vector<8x1xf32>
    %53 = arith.mulf %49, %52 : vector<8x1xf32>
    %54 = arith.mulf %51, %51 : vector<8x1xf32>
    %55 = arith.subf %53, %54 : vector<8x1xf32>
    %56 = vector.broadcast %51 : vector<8x1xf32> to vector<8x32xf32>
    %57 = arith.subf %42, %56 : vector<8x32xf32>
    %cst_16 = arith.constant 9.99999974E-6 : f32
    %58 = vector.broadcast %cst_16 : f32 to vector<8x1xf32>
    %59 = arith.addf %55, %58 : vector<8x1xf32>
    %60 = math.rsqrt %59 : vector<8x1xf32>
    %61 = vector.broadcast %60 : vector<8x1xf32> to vector<8x32xf32>
    %62 = arith.mulf %57, %61 : vector<8x32xf32>
    %63 = vector.broadcast %43 : vector<1x32xf32> to vector<8x32xf32>
    %64 = arith.mulf %62, %63 : vector<8x32xf32>
    %65 = vector.broadcast %44 : vector<1x32xf32> to vector<8x32xf32>
    %66 = arith.addf %64, %65 : vector<8x32xf32>
    %cst_17 = arith.constant 0.000000e+00 : f32
    %67 = vector.broadcast %cst_17 : f32 to vector<8x32xf32>
    %68 = arith.maximumf %66, %67 : vector<8x32xf32>
    %69 = arith.truncf %68 : vector<8x32xf32> to vector<8x32xbf16>
    %cst_18 = arith.constant dense<0.000000e+00> : vector<8x32xf32>
    %70 = tpu.matmul %69, %11, %cst_18 {dimension_numbers = #tpu.dot_dimension_numbers<[1], [0], [0], [1], [0, 0, 1, 1], [], []>} : vector<8x32xbf16>, vector<32x32xbf16>, vector<8x32xf32> -> vector<8x32xf32>
    %71 = vector.extract_strided_slice %2 {offsets = [6, 0], sizes = [1, 32], strides = [1, 1]} : vector<13x32xf32> to vector<1x32xf32>
    %72 = vector.broadcast %71 : vector<1x32xf32> to vector<8x32xf32>
    %73 = arith.addf %70, %72 : vector<8x32xf32>
    %74 = arith.addf %73, %9 : vector<8x32xf32>
    %75 = vector.extract_strided_slice %1 {offsets = [96, 0], sizes = [32, 32], strides = [1, 1]} : vector<160x32xbf16> to vector<32x32xbf16>
    %76 = vector.extract_strided_slice %1 {offsets = [128, 0], sizes = [32, 32], strides = [1, 1]} : vector<160x32xbf16> to vector<32x32xbf16>
    %77 = vector.extract_strided_slice %2 {offsets = [7, 0], sizes = [1, 32], strides = [1, 1]} : vector<13x32xf32> to vector<1x32xf32>
    %78 = vector.extract_strided_slice %2 {offsets = [8, 0], sizes = [1, 32], strides = [1, 1]} : vector<13x32xf32> to vector<1x32xf32>
    %cst_19 = arith.constant dense<0.000000e+00> : vector<8xf32>
    %79 = vector.multi_reduction <add>, %74, %cst_19 [1] : vector<8x32xf32> to vector<8xf32>
    %80 = vector.shape_cast %79 : vector<8xf32> to vector<8x1xf32>
    %81 = arith.mulf %74, %74 : vector<8x32xf32>
    %cst_20 = arith.constant dense<0.000000e+00> : vector<8xf32>
    %82 = vector.multi_reduction <add>, %81, %cst_20 [1] : vector<8x32xf32> to vector<8xf32>
    %83 = vector.shape_cast %82 : vector<8xf32> to vector<8x1xf32>
    %cst_21 = arith.constant 3.125000e-02 : f32
    %84 = vector.broadcast %cst_21 : f32 to vector<8x1xf32>
    %85 = arith.mulf %80, %84 : vector<8x1xf32>
    %cst_22 = arith.constant 3.125000e-02 : f32
    %86 = vector.broadcast %cst_22 : f32 to vector<8x1xf32>
    %87 = arith.mulf %83, %86 : vector<8x1xf32>
    %88 = arith.mulf %85, %85 : vector<8x1xf32>
    %89 = arith.subf %87, %88 : vector<8x1xf32>
    %90 = vector.broadcast %85 : vector<8x1xf32> to vector<8x32xf32>
    %91 = arith.subf %74, %90 : vector<8x32xf32>
    %cst_23 = arith.constant 9.99999974E-6 : f32
    %92 = vector.broadcast %cst_23 : f32 to vector<8x1xf32>
    %93 = arith.addf %89, %92 : vector<8x1xf32>
    %94 = math.rsqrt %93 : vector<8x1xf32>
    %95 = vector.broadcast %94 : vector<8x1xf32> to vector<8x32xf32>
    %96 = arith.mulf %91, %95 : vector<8x32xf32>
    %97 = vector.broadcast %77 : vector<1x32xf32> to vector<8x32xf32>
    %98 = arith.mulf %96, %97 : vector<8x32xf32>
    %99 = vector.broadcast %78 : vector<1x32xf32> to vector<8x32xf32>
    %100 = arith.addf %98, %99 : vector<8x32xf32>
    %cst_24 = arith.constant 0.000000e+00 : f32
    %101 = vector.broadcast %cst_24 : f32 to vector<8x32xf32>
    %102 = arith.maximumf %100, %101 : vector<8x32xf32>
    %103 = arith.truncf %102 : vector<8x32xf32> to vector<8x32xbf16>
    %cst_25 = arith.constant dense<0.000000e+00> : vector<8x32xf32>
    %104 = tpu.matmul %103, %75, %cst_25 {dimension_numbers = #tpu.dot_dimension_numbers<[1], [0], [0], [1], [0, 0, 1, 1], [], []>} : vector<8x32xbf16>, vector<32x32xbf16>, vector<8x32xf32> -> vector<8x32xf32>
    %105 = vector.extract_strided_slice %2 {offsets = [9, 0], sizes = [1, 32], strides = [1, 1]} : vector<13x32xf32> to vector<1x32xf32>
    %106 = vector.broadcast %105 : vector<1x32xf32> to vector<8x32xf32>
    %107 = arith.addf %104, %106 : vector<8x32xf32>
    %108 = vector.extract_strided_slice %2 {offsets = [10, 0], sizes = [1, 32], strides = [1, 1]} : vector<13x32xf32> to vector<1x32xf32>
    %109 = vector.extract_strided_slice %2 {offsets = [11, 0], sizes = [1, 32], strides = [1, 1]} : vector<13x32xf32> to vector<1x32xf32>
    %cst_26 = arith.constant dense<0.000000e+00> : vector<8xf32>
    %110 = vector.multi_reduction <add>, %107, %cst_26 [1] : vector<8x32xf32> to vector<8xf32>
    %111 = vector.shape_cast %110 : vector<8xf32> to vector<8x1xf32>
    %112 = arith.mulf %107, %107 : vector<8x32xf32>
    %cst_27 = arith.constant dense<0.000000e+00> : vector<8xf32>
    %113 = vector.multi_reduction <add>, %112, %cst_27 [1] : vector<8x32xf32> to vector<8xf32>
    %114 = vector.shape_cast %113 : vector<8xf32> to vector<8x1xf32>
    %cst_28 = arith.constant 3.125000e-02 : f32
    %115 = vector.broadcast %cst_28 : f32 to vector<8x1xf32>
    %116 = arith.mulf %111, %115 : vector<8x1xf32>
    %cst_29 = arith.constant 3.125000e-02 : f32
    %117 = vector.broadcast %cst_29 : f32 to vector<8x1xf32>
    %118 = arith.mulf %114, %117 : vector<8x1xf32>
    %119 = arith.mulf %116, %116 : vector<8x1xf32>
    %120 = arith.subf %118, %119 : vector<8x1xf32>
    %121 = vector.broadcast %116 : vector<8x1xf32> to vector<8x32xf32>
    %122 = arith.subf %107, %121 : vector<8x32xf32>
    %cst_30 = arith.constant 9.99999974E-6 : f32
    %123 = vector.broadcast %cst_30 : f32 to vector<8x1xf32>
    %124 = arith.addf %120, %123 : vector<8x1xf32>
    %125 = math.rsqrt %124 : vector<8x1xf32>
    %126 = vector.broadcast %125 : vector<8x1xf32> to vector<8x32xf32>
    %127 = arith.mulf %122, %126 : vector<8x32xf32>
    %128 = vector.broadcast %108 : vector<1x32xf32> to vector<8x32xf32>
    %129 = arith.mulf %127, %128 : vector<8x32xf32>
    %130 = vector.broadcast %109 : vector<1x32xf32> to vector<8x32xf32>
    %131 = arith.addf %129, %130 : vector<8x32xf32>
    %cst_31 = arith.constant 0.000000e+00 : f32
    %132 = vector.broadcast %cst_31 : f32 to vector<8x32xf32>
    %133 = arith.maximumf %131, %132 : vector<8x32xf32>
    %134 = arith.truncf %133 : vector<8x32xf32> to vector<8x32xbf16>
    %cst_32 = arith.constant dense<0.000000e+00> : vector<8x32xf32>
    %135 = tpu.matmul %134, %76, %cst_32 {dimension_numbers = #tpu.dot_dimension_numbers<[1], [0], [0], [1], [0, 0, 1, 1], [], []>} : vector<8x32xbf16>, vector<32x32xbf16>, vector<8x32xf32> -> vector<8x32xf32>
    %136 = vector.extract_strided_slice %2 {offsets = [12, 0], sizes = [1, 32], strides = [1, 1]} : vector<13x32xf32> to vector<1x32xf32>
    %137 = vector.broadcast %136 : vector<1x32xf32> to vector<8x32xf32>
    %138 = arith.addf %135, %137 : vector<8x32xf32>
    %139 = arith.addf %138, %74 : vector<8x32xf32>
    %140 = arith.truncf %139 : vector<8x32xf32> to vector<8x32xbf16>
    %c0_33 = arith.constant 0 : index
    %c0_34 = arith.constant 0 : index
    %141 = vector.load %arg4[%c0_33, %c0_34] : memref<32x12xf32, #tpu.memory_space<vmem>>, vector<32x12xf32>
    %142 = arith.truncf %141 : vector<32x12xf32> to vector<32x12xbf16>
    %cst_35 = arith.constant dense<0.000000e+00> : vector<8x12xf32>
    %143 = tpu.matmul %140, %142, %cst_35 {dimension_numbers = #tpu.dot_dimension_numbers<[1], [0], [0], [1], [0, 0, 1, 1], [], []>} : vector<8x32xbf16>, vector<32x12xbf16>, vector<8x12xf32> -> vector<8x12xf32>
    %c0_36 = arith.constant 0 : index
    %c0_37 = arith.constant 0 : index
    %144 = vector.load %arg5[%c0_36, %c0_37] : memref<1x12xf32, #tpu.memory_space<vmem>>, vector<1x12xf32>
    %145 = vector.broadcast %144 : vector<1x12xf32> to vector<8x12xf32>
    %146 = arith.addf %143, %145 : vector<8x12xf32>
    %c0_38 = arith.constant 0 : index
    %147 = memref.load %arg0[%c0_38] : memref<1xf32, #tpu.memory_space<smem>>
    %cst_39 = arith.constant 1.000000e+00 : f32
    %148 = arith.divf %cst_39, %147 : f32
    %c0_40 = arith.constant 0 : index
    %c0_41 = arith.constant 0 : index
    %149 = vector.load %arg6[%c0_40, %c0_41] : memref<8x12xf32, #tpu.memory_space<vmem>>, vector<8x12xf32>
    %150 = arith.addf %146, %149 : vector<8x12xf32>
    %151 = vector.broadcast %148 : f32 to vector<8x12xf32>
    %152 = arith.mulf %150, %151 : vector<8x12xf32>
    %153 = vector.extract_strided_slice %152 {offsets = [0, 0], sizes = [8, 4], strides = [1, 1]} : vector<8x12xf32> to vector<8x4xf32>
    %154 = vector.extract_strided_slice %152 {offsets = [0, 4], sizes = [8, 4], strides = [1, 1]} : vector<8x12xf32> to vector<8x4xf32>
    %155 = vector.extract_strided_slice %152 {offsets = [0, 8], sizes = [8, 4], strides = [1, 1]} : vector<8x12xf32> to vector<8x4xf32>
    %156 = arith.maximumf %153, %154 : vector<8x4xf32>
    %157 = arith.maximumf %156, %155 : vector<8x4xf32>
    %158 = arith.subf %153, %157 : vector<8x4xf32>
    %159 = math.exp %158 : vector<8x4xf32>
    %160 = arith.subf %154, %157 : vector<8x4xf32>
    %161 = math.exp %160 : vector<8x4xf32>
    %162 = arith.subf %155, %157 : vector<8x4xf32>
    %163 = math.exp %162 : vector<8x4xf32>
    %164 = arith.addf %159, %161 : vector<8x4xf32>
    %165 = arith.addf %164, %163 : vector<8x4xf32>
    %cst_42 = arith.constant 1.000000e+00 : f32
    %166 = vector.broadcast %cst_42 : f32 to vector<8x4xf32>
    %167 = arith.divf %166, %165 : vector<8x4xf32>
    %168 = arith.mulf %159, %167 : vector<8x4xf32>
    %169 = arith.mulf %161, %167 : vector<8x4xf32>
    %170 = arith.mulf %163, %167 : vector<8x4xf32>
    %171 = tpu.concatenate %168, %169, %170 in 1 : vector<8x4xf32>, vector<8x4xf32>, vector<8x4xf32> -> vector<8x12xf32>
    %c0_43 = arith.constant 0 : index
    %c0_44 = arith.constant 0 : index
    %172 = vector.load %arg7[%c0_43, %c0_44] : memref<8x12xf32, #tpu.memory_space<vmem>>, vector<8x12xf32>
    tpu.vector_store %arg7[%c0_43, %c0_44], %171 {strides = array<i32>} : memref<8x12xf32, #tpu.memory_space<vmem>>, vector<8x12xf32>,
    return
  }
}

</mosaic_0001>

<llo_original>
// kernel: generator_forward.1
$region0: #{generator_forward.1}
  #allocation0 [shape = 'u32[]', space=smem, size = 0x4, offset = 0x4, fixed_abs, tag = 'smem constant byte address 0x4 - core index']
  #allocation1 [shape = 'u32[144,128]{1,0:T(1,128)}', space=vmem, size = 0x12000, scoped, tag = 'internal scratch']
  #allocation2 [shape = 'f32[1]{0:T(128)S(6)}', space=smem, size = 0x200, scoped, tag = 'scoped memory for generator_forward.1']
  %s0 = inlined_call_operand.<no memory space> [shape: f32[1], index: 0, kind: input, shape index: {}]
  %s1 = inlined_call_operand.vmem [shape: f32[8,32], index: 1, kind: input, shape index: {}]
  %s2 = inlined_call_operand.vmem [shape: f32[160,32], index: 2, kind: input, shape index: {}]
  %s3 = inlined_call_operand.vmem [shape: f32[13,32], index: 3, kind: input, shape index: {}]
  %s4 = inlined_call_operand.vmem [shape: f32[32,12], index: 4, kind: input, shape index: {}]
  %s5 = inlined_call_operand.vmem [shape: f32[1,12], index: 5, kind: input, shape index: {}]
  %s6 = inlined_call_operand.vmem [shape: f32[8,12], index: 6, kind: input, shape index: {}]
  %s7 = inlined_call_operand.vmem [shape: f32[8,12], index: 7, kind: output, shape index: {}]
  %s8 = sld [smem:[#allocation0]]
  $region38: #{generator_forward.1} parent=0
    _
  %s10 = ssub.s32 1, %s8
  %s11 = scalar_select 0, %s10, %s8
  %12 = sst [smem:[#allocation2]] %s0
  // Predicated region
  $region2: #{generator_forward.1} parent=0 // pred_check
    _
  $region3: #{generator_forward.1} parent=0 // pred_check_branch
    %14 = sbr.rel (0) target = $region5
  $region4: #{generator_forward.1} parent=0 // pred_region
    _
  $region5: #{generator_forward.1} parent=0 // pred_fallthru
    _
  // Predicated region
  $region6: #{generator_forward.1} parent=0 // pred_check
    _
  $region7: #{generator_forward.1} parent=0 // pred_check_branch
    %16 = sbr.rel (0) target = $region9
  $region8: #{generator_forward.1} parent=0 // pred_region
    _
  $region9: #{generator_forward.1} parent=0 // pred_fallthru
    _
  // Predicated region
  $region10: #{generator_forward.1} parent=0 // pred_check
    _
  $region11: #{generator_forward.1} parent=0 // pred_check_branch
    %18 = sbr.rel (0) target = $region13
  $region12: #{generator_forward.1} parent=0 // pred_region
    _
  $region13: #{generator_forward.1} parent=0 // pred_fallthru
    _
  // Predicated region
  $region14: #{generator_forward.1} parent=0 // pred_check
    _
  $region15: #{generator_forward.1} parent=0 // pred_check_branch
    %20 = sbr.rel (0) target = $region17
  $region16: #{generator_forward.1} parent=0 // pred_region
    _
  $region17: #{generator_forward.1} parent=0 // pred_fallthru
    _
  // Predicated region
  $region18: #{generator_forward.1} parent=0 // pred_check
    _
  $region19: #{generator_forward.1} parent=0 // pred_check_branch
    %22 = sbr.rel (0) target = $region21
  $region20: #{generator_forward.1} parent=0 // pred_region
    _
  $region21: #{generator_forward.1} parent=0 // pred_fallthru
    _
  // Predicated region
  $region22: #{generator_forward.1} parent=0 // pred_check
    _
  $region23: #{generator_forward.1} parent=0 // pred_check_branch
    %24 = sbr.rel (0) target = $region25
  $region24: #{generator_forward.1} parent=0 // pred_region
    _
  $region25: #{generator_forward.1} parent=0 // pred_fallthru
    _
  // Predicated region
  $region26: #{generator_forward.1} parent=0 // pred_check
    _
  $region27: #{generator_forward.1} parent=0 // pred_check_branch
    %26 = sbr.rel (0) target = $region29
  $region28: #{generator_forward.1} parent=0 // pred_region
    _
  $region29: #{generator_forward.1} parent=0 // pred_fallthru
    _
  %v28 = vld [vmem:[%s2] sm:$0xff]
  %v29 = vld [vmem:[%s2 + $0x8] sm:$0xff]
  %v30 = vld [vmem:[%s2 + $0x10] sm:$0xff]
  %v31 = vld [vmem:[%s2 + $0x18] sm:$0xff]
  %v32 = vld [vmem:[%s2 + $0x20] sm:$0xff]
  %v33 = vld [vmem:[%s2 + $0x28] sm:$0xff]
  %v34 = vld [vmem:[%s2 + $0x30] sm:$0xff]
  %v35 = vld [vmem:[%s2 + $0x38] sm:$0xff]
  %v36 = vld [vmem:[%s2 + $0x40] sm:$0xff]
  %v37 = vld [vmem:[%s2 + $0x48] sm:$0xff]
  %v38 = vld [vmem:[%s2 + $0x50] sm:$0xff]
  %v39 = vld [vmem:[%s2 + $0x58] sm:$0xff]
  %v40 = vld [vmem:[%s2 + $0x60] sm:$0xff]
  %v41 = vld [vmem:[%s2 + $0x68] sm:$0xff]
  %v42 = vld [vmem:[%s2 + $0x70] sm:$0xff]
  %v43 = vld [vmem:[%s2 + $0x78] sm:$0xff]
  %v44 = vld [vmem:[%s2 + $0x80] sm:$0xff]
  %v45 = vld [vmem:[%s2 + $0x88] sm:$0xff]
  %v46 = vld [vmem:[%s2 + $0x90] sm:$0xff]
  %v47 = vld [vmem:[%s2 + $0x98] sm:$0xff]
  %v48 = vpack.c.bf16 %v29, %v28
  %v49 = vpack.c.bf16 %v31, %v30
  %v50 = vpack.c.bf16 %v33, %v32
  %v51 = vpack.c.bf16 %v35, %v34
  %v52 = vpack.c.bf16 %v37, %v36
  %v53 = vpack.c.bf16 %v39, %v38
  %v54 = vpack.c.bf16 %v41, %v40
  %v55 = vpack.c.bf16 %v43, %v42
  %v56 = vpack.c.bf16 %v45, %v44
  %v57 = vpack.c.bf16 %v47, %v46
  %v58 = vld [vmem:[%s3] sm:$0xff]
  %v59 = vld [vmem:[%s3 + $0x8] sm:$0x1f]
  %v60 = vld [vmem:[%s1] sm:$0xff]
  %v61 = vpack.c.bf16 %v60, %v60
  %v62 = vlaneseq
  %v63 = vshrl.u32 %v62, 7
  %v64 = vsub.s32 0, %v63
  %v65 = vrot.slane %v58, %v64
  %vm66 = vcmask 261120
  %v68 = vsel %vm66, %v61, 0
  %70 = vmatprep.subr.bf16.mxu0 0
  %71 = vmatpush1.bf16.msra.mxu0 %v48
  %72 = vmatprep.subr.bf16.mxu0 0
  %73 = vmatpush1.bf16.msra.mxu0 %v49
  %74 = vmatprep.subr.bf16.mxu0 0
  %75 = vmatpush1.bf16.msra.mxu0 0
  %76 = vmatprep.subr.bf16.mxu0 0
  %77 = vmatpush1.bf16.msra.mxu0 0
  %78 = vmatprep.subr.bf16.mxu0 0
  %79 = vmatpush1.bf16.msra.mxu0 0
  %80 = vmatprep.subr.bf16.mxu0 0
  %81 = vmatpush1.bf16.msra.mxu0 0
  %82 = vmatprep.subr.bf16.mxu0 0
  %83 = vmatpush1.bf16.msra.mxu0 0
  %84 = vmatprep.subr.bf16.mxu0 0
  %85 = vmatpush1.bf16.msra.mxu0 0
  %86 = vmatprep.subr.bf16.mxu0 0
  %87 = vmatpush1.bf16.msra.mxu0 0
  %88 = vmatprep.subr.bf16.mxu0 0
  %89 = vmatpush1.bf16.msra.mxu0 0
  %90 = vmatprep.subr.bf16.mxu0 0
  %91 = vmatpush1.bf16.msra.mxu0 0
  %92 = vmatprep.subr.bf16.mxu0 0
  %93 = vmatpush1.bf16.msra.mxu0 0
  %94 = vmatprep.subr.bf16.mxu0 0
  %95 = vmatpush1.bf16.msra.mxu0 0
  %96 = vmatprep.subr.bf16.mxu0 0
  %97 = vmatpush1.bf16.msra.mxu0 0
  %98 = vmatprep.subr.bf16.mxu0 0
  %99 = vmatpush1.bf16.msra.mxu0 0
  %100 = vmatprep.subr.bf16.mxu0 0
  %101 = vmatpush1.bf16.msra.mxu0 0
  %102 = vmatprep.mubr.bf16.mxu0 0
  %103 = vmatmul.mubr.bf16.gmra.mrb[0].mxu0 %v68
  %v104 = vpop.f32.mrb[0].mxu0
  %v105 = vadd.f32 %v65, %v104
  %v106 = vpop.f32.mrb[0].mxu0
  %v107 = vpop.f32.mrb[0].mxu0
  %v108 = vpop.f32.mrb[0].mxu0
  %109 = vdwg.mxu0
  %v110 = vsel %vm66, %v105, 0.0
  %111 = vadd.xlane.f32.xlu0 %v110
  %v112 = vpop.xlane.xlu0 %111
  %v113 = vmul.f32 %v105, %v105
  %v114 = vsel %vm66, %v113, 0.0
  %115 = vadd.xlane.f32.xlu0 %v114
  %v116 = vpop.xlane.xlu0 %115
  %v117 = vmul.f32 %v112, 0.03125
  %v118 = vmul.f32 %v116, 0.03125
  %v119 = vmul.f32 %v117, %v117
  %v120 = vsub.f32 %v118, %v119
  %v121 = vsub.f32 %v105, %v117
  %v122 = vadd.f32 %v120, 1e-05
  %v123 = vrsqrt.pop %v122
  %v124 = vmul.f32 %v121, %v123
  %v125 = vlaneseq
  %v126 = vshrl.u32 %v125, 7
  %v127 = vsub.s32 1, %v126
  %v128 = vrot.slane %v58, %v127
  %v129 = vmul.f32 %v124, %v128
  %v130 = vlaneseq
  %v131 = vshrl.u32 %v130, 7
  %v132 = vsub.s32 2, %v131
  %v133 = vrot.slane %v58, %v132
  %v134 = vadd.f32 %v129, %v133
  %v135 = vmax.f32 %v134, 0.0
  %v136 = vpack.c.bf16 %v135, %v135
  %v137 = vlaneseq
  %v138 = vshrl.u32 %v137, 7
  %v139 = vsub.s32 3, %v138
  %v140 = vrot.slane %v58, %v139
  %v142 = vsel %vm66, %v136, 0
  %144 = vmatprep.subr.bf16.mxu0 0
  %145 = vmatpush1.bf16.msra.mxu0 %v50
  %146 = vmatprep.subr.bf16.mxu0 0
  %147 = vmatpush1.bf16.msra.mxu0 %v51
  %148 = vmatprep.subr.bf16.mxu0 0
  %149 = vmatpush1.bf16.msra.mxu0 0
  %150 = vmatprep.subr.bf16.mxu0 0
  %151 = vmatpush1.bf16.msra.mxu0 0
  %152 = vmatprep.subr.bf16.mxu0 0
  %153 = vmatpush1.bf16.msra.mxu0 0
  %154 = vmatprep.subr.bf16.mxu0 0
  %155 = vmatpush1.bf16.msra.mxu0 0
  %156 = vmatprep.subr.bf16.mxu0 0
  %157 = vmatpush1.bf16.msra.mxu0 0
  %158 = vmatprep.subr.bf16.mxu0 0
  %159 = vmatpush1.bf16.msra.mxu0 0
  %160 = vmatprep.subr.bf16.mxu0 0
  %161 = vmatpush1.bf16.msra.mxu0 0
  %162 = vmatprep.subr.bf16.mxu0 0
  %163 = vmatpush1.bf16.msra.mxu0 0
  %164 = vmatprep.subr.bf16.mxu0 0
  %165 = vmatpush1.bf16.msra.mxu0 0
  %166 = vmatprep.subr.bf16.mxu0 0
  %167 = vmatpush1.bf16.msra.mxu0 0
  %168 = vmatprep.subr.bf16.mxu0 0
  %169 = vmatpush1.bf16.msra.mxu0 0
  %170 = vmatprep.subr.bf16.mxu0 0
  %171 = vmatpush1.bf16.msra.mxu0 0
  %172 = vmatprep.subr.bf16.mxu0 0
  %173 = vmatpush1.bf16.msra.mxu0 0
  %174 = vmatprep.subr.bf16.mxu0 0
  %175 = vmatpush1.bf16.msra.mxu0 0
  %176 = vmatprep.mubr.bf16.mxu0 0
  %177 = vmatmul.mubr.bf16.gmra.mrb[0].mxu0 %v142
  %v178 = vpop.f32.mrb[0].mxu0
  %v179 = vadd.f32 %v140, %v178
  %v180 = vpop.f32.mrb[0].mxu0
  %v181 = vpop.f32.mrb[0].mxu0
  %v182 = vpop.f32.mrb[0].mxu0
  %183 = vdwg.mxu0
  %v184 = vsel %vm66, %v179, 0.0
  %185 = vadd.xlane.f32.xlu0 %v184
  %v186 = vpop.xlane.xlu0 %185
  %v187 = vmul.f32 %v179, %v179
  %v188 = vsel %vm66, %v187, 0.0
  %189 = vadd.xlane.f32.xlu0 %v188
  %v190 = vpop.xlane.xlu0 %189
  %v191 = vmul.f32 %v186, 0.03125
  %v192 = vmul.f32 %v190, 0.03125
  %v193 = vmul.f32 %v191, %v191
  %v194 = vsub.f32 %v192, %v193
  %v195 = vsub.f32 %v179, %v191
  %v196 = vadd.f32 %v194, 1e-05
  %v197 = vrsqrt.pop %v196
  %v198 = vmul.f32 %v195, %v197
  %v199 = vlaneseq
  %v200 = vshrl.u32 %v199, 7
  %v201 = vsub.s32 4, %v200
  %v202 = vrot.slane %v58, %v201
  %v203 = vmul.f32 %v198, %v202
  %v204 = vlaneseq
  %v205 = vshrl.u32 %v204, 7
  %v206 = vsub.s32 5, %v205
  %v207 = vrot.slane %v58, %v206
  %v208 = vadd.f32 %v203, %v207
  %v209 = vmax.f32 %v208, 0.0
  %v210 = vpack.c.bf16 %v209, %v209
  %v211 = vlaneseq
  %v212 = vshrl.u32 %v211, 7
  %v213 = vsub.s32 6, %v212
  %v214 = vrot.slane %v58, %v213
  %v216 = vsel %vm66, %v210, 0
  %218 = vmatprep.subr.bf16.mxu0 0
  %219 = vmatpush1.bf16.msra.mxu0 %v52
  %220 = vmatprep.subr.bf16.mxu0 0
  %221 = vmatpush1.bf16.msra.mxu0 %v53
  %222 = vmatprep.subr.bf16.mxu0 0
  %223 = vmatpush1.bf16.msra.mxu0 0
  %224 = vmatprep.subr.bf16.mxu0 0
  %225 = vmatpush1.bf16.msra.mxu0 0
  %226 = vmatprep.subr.bf16.mxu0 0
  %227 = vmatpush1.bf16.msra.mxu0 0
  %228 = vmatprep.subr.bf16.mxu0 0
  %229 = vmatpush1.bf16.msra.mxu0 0
  %230 = vmatprep.subr.bf16.mxu0 0
  %231 = vmatpush1.bf16.msra.mxu0 0
  %232 = vmatprep.subr.bf16.mxu0 0
  %233 = vmatpush1.bf16.msra.mxu0 0
  %234 = vmatprep.subr.bf16.mxu0 0
  %235 = vmatpush1.bf16.msra.mxu0 0
  %236 = vmatprep.subr.bf16.mxu0 0
  %237 = vmatpush1.bf16.msra.mxu0 0
  %238 = vmatprep.subr.bf16.mxu0 0
  %239 = vmatpush1.bf16.msra.mxu0 0
  %240 = vmatprep.subr.bf16.mxu0 0
  %241 = vmatpush1.bf16.msra.mxu0 0
  %242 = vmatprep.subr.bf16.mxu0 0
  %243 = vmatpush1.bf16.msra.mxu0 0
  %244 = vmatprep.subr.bf16.mxu0 0
  %245 = vmatpush1.bf16.msra.mxu0 0
  %246 = vmatprep.subr.bf16.mxu0 0
  %247 = vmatpush1.bf16.msra.mxu0 0
  %248 = vmatprep.subr.bf16.mxu0 0
  %249 = vmatpush1.bf16.msra.mxu0 0
  %250 = vmatprep.mubr.bf16.mxu0 0
  %251 = vmatmul.mubr.bf16.gmra.mrb[0].mxu0 %v216
  %v252 = vpop.f32.mrb[0].mxu0
  %v253 = vadd.f32 %v214, %v252
  %v254 = vpop.f32.mrb[0].mxu0
  %v255 = vpop.f32.mrb[0].mxu0
  %v256 = vpop.f32.mrb[0].mxu0
  %257 = vdwg.mxu0
  %v258 = vadd.f32 %v253, %v105
  %v259 = vsel %vm66, %v258, 0.0
  %260 = vadd.xlane.f32.xlu0 %v259
  %v261 = vpop.xlane.xlu0 %260
  %v262 = vmul.f32 %v258, %v258
  %v263 = vsel %vm66, %v262, 0.0
  %264 = vadd.xlane.f32.xlu0 %v263
  %v265 = vpop.xlane.xlu0 %264
  %v266 = vmul.f32 %v261, 0.03125
  %v267 = vmul.f32 %v265, 0.03125
  %v268 = vmul.f32 %v266, %v266
  %v269 = vsub.f32 %v267, %v268
  %v270 = vsub.f32 %v258, %v266
  %v271 = vadd.f32 %v269, 1e-05
  %v272 = vrsqrt.pop %v271
  %v273 = vmul.f32 %v270, %v272
  %v274 = vlaneseq
  %v275 = vshrl.u32 %v274, 7
  %v276 = vsub.s32 7, %v275
  %v277 = vrot.slane %v58, %v276
  %v278 = vmul.f32 %v273, %v277
  %v279 = vlaneseq
  %v280 = vshrl.u32 %v279, 7
  %v281 = vsub.s32 0, %v280
  %v282 = vrot.slane %v59, %v281
  %v283 = vadd.f32 %v278, %v282
  %v284 = vmax.f32 %v283, 0.0
  %v285 = vpack.c.bf16 %v284, %v284
  %v286 = vlaneseq
  %v287 = vshrl.u32 %v286, 7
  %v288 = vsub.s32 1, %v287
  %v289 = vrot.slane %v59, %v288
  %v291 = vsel %vm66, %v285, 0
  %293 = vmatprep.subr.bf16.mxu0 0
  %294 = vmatpush1.bf16.msra.mxu0 %v54
  %295 = vmatprep.subr.bf16.mxu0 0
  %296 = vmatpush1.bf16.msra.mxu0 %v55
  %297 = vmatprep.subr.bf16.mxu0 0
  %298 = vmatpush1.bf16.msra.mxu0 0
  %299 = vmatprep.subr.bf16.mxu0 0
  %300 = vmatpush1.bf16.msra.mxu0 0
  %301 = vmatprep.subr.bf16.mxu0 0
  %302 = vmatpush1.bf16.msra.mxu0 0
  %303 = vmatprep.subr.bf16.mxu0 0
  %304 = vmatpush1.bf16.msra.mxu0 0
  %305 = vmatprep.subr.bf16.mxu0 0
  %306 = vmatpush1.bf16.msra.mxu0 0
  %307 = vmatprep.subr.bf16.mxu0 0
  %308 = vmatpush1.bf16.msra.mxu0 0
  %309 = vmatprep.subr.bf16.mxu0 0
  %310 = vmatpush1.bf16.msra.mxu0 0
  %311 = vmatprep.subr.bf16.mxu0 0
  %312 = vmatpush1.bf16.msra.mxu0 0
  %313 = vmatprep.subr.bf16.mxu0 0
  %314 = vmatpush1.bf16.msra.mxu0 0
  %315 = vmatprep.subr.bf16.mxu0 0
  %316 = vmatpush1.bf16.msra.mxu0 0
  %317 = vmatprep.subr.bf16.mxu0 0
  %318 = vmatpush1.bf16.msra.mxu0 0
  %319 = vmatprep.subr.bf16.mxu0 0
  %320 = vmatpush1.bf16.msra.mxu0 0
  %321 = vmatprep.subr.bf16.mxu0 0
  %322 = vmatpush1.bf16.msra.mxu0 0
  %323 = vmatprep.subr.bf16.mxu0 0
  %324 = vmatpush1.bf16.msra.mxu0 0
  %325 = vmatprep.mubr.bf16.mxu0 0
  %326 = vmatmul.mubr.bf16.gmra.mrb[0].mxu0 %v291
  %v327 = vpop.f32.mrb[0].mxu0
  %v328 = vadd.f32 %v289, %v327
  %v329 = vpop.f32.mrb[0].mxu0
  %v330 = vpop.f32.mrb[0].mxu0
  %v331 = vpop.f32.mrb[0].mxu0
  %332 = vdwg.mxu0
  %v333 = vsel %vm66, %v328, 0.0
  %334 = vadd.xlane.f32.xlu0 %v333
  %v335 = vpop.xlane.xlu0 %334
  %v336 = vmul.f32 %v328, %v328
  %v337 = vsel %vm66, %v336, 0.0
  %338 = vadd.xlane.f32.xlu0 %v337
  %v339 = vpop.xlane.xlu0 %338
  %v340 = vmul.f32 %v335, 0.03125
  %v341 = vmul.f32 %v339, 0.03125
  %v342 = vmul.f32 %v340, %v340
  %v343 = vsub.f32 %v341, %v342
  %v344 = vsub.f32 %v328, %v340
  %v345 = vadd.f32 %v343, 1e-05
  %v346 = vrsqrt.pop %v345
  %v347 = vmul.f32 %v344, %v346
  %v348 = vlaneseq
  %v349 = vshrl.u32 %v348, 7
  %v350 = vsub.s32 2, %v349
  %v351 = vrot.slane %v59, %v350
  %v352 = vmul.f32 %v347, %v351
  %v353 = vlaneseq
  %v354 = vshrl.u32 %v353, 7
  %v355 = vsub.s32 3, %v354
  %v356 = vrot.slane %v59, %v355
  %v357 = vadd.f32 %v352, %v356
  %v358 = vmax.f32 %v357, 0.0
  %v359 = vpack.c.bf16 %v358, %v358
  %v360 = vlaneseq
  %v361 = vshrl.u32 %v360, 7
  %v362 = vsub.s32 4, %v361
  %v363 = vrot.slane %v59, %v362
  %v365 = vsel %vm66, %v359, 0
  %367 = vmatprep.subr.bf16.mxu0 0
  %368 = vmatpush1.bf16.msra.mxu0 %v56
  %369 = vmatprep.subr.bf16.mxu0 0
  %370 = vmatpush1.bf16.msra.mxu0 %v57
  %371 = vmatprep.subr.bf16.mxu0 0
  %372 = vmatpush1.bf16.msra.mxu0 0
  %373 = vmatprep.subr.bf16.mxu0 0
  %374 = vmatpush1.bf16.msra.mxu0 0
  %375 = vmatprep.subr.bf16.mxu0 0
  %376 = vmatpush1.bf16.msra.mxu0 0
  %377 = vmatprep.subr.bf16.mxu0 0
  %378 = vmatpush1.bf16.msra.mxu0 0
  %379 = vmatprep.subr.bf16.mxu0 0
  %380 = vmatpush1.bf16.msra.mxu0 0
  %381 = vmatprep.subr.bf16.mxu0 0
  %382 = vmatpush1.bf16.msra.mxu0 0
  %383 = vmatprep.subr.bf16.mxu0 0
  %384 = vmatpush1.bf16.msra.mxu0 0
  %385 = vmatprep.subr.bf16.mxu0 0
  %386 = vmatpush1.bf16.msra.mxu0 0
  %387 = vmatprep.subr.bf16.mxu0 0
  %388 = vmatpush1.bf16.msra.mxu0 0
  %389 = vmatprep.subr.bf16.mxu0 0
  %390 = vmatpush1.bf16.msra.mxu0 0
  %391 = vmatprep.subr.bf16.mxu0 0
  %392 = vmatpush1.bf16.msra.mxu0 0
  %393 = vmatprep.subr.bf16.mxu0 0
  %394 = vmatpush1.bf16.msra.mxu0 0
  %395 = vmatprep.subr.bf16.mxu0 0
  %396 = vmatpush1.bf16.msra.mxu0 0
  %397 = vmatprep.subr.bf16.mxu0 0
  %398 = vmatpush1.bf16.msra.mxu0 0
  %399 = vmatprep.mubr.bf16.mxu0 0
  %400 = vmatmul.mubr.bf16.gmra.mrb[0].mxu0 %v365
  %v401 = vpop.f32.mrb[0].mxu0
  %v402 = vadd.f32 %v363, %v401
  %v403 = vpop.f32.mrb[0].mxu0
  %v404 = vpop.f32.mrb[0].mxu0
  %v405 = vpop.f32.mrb[0].mxu0
  %406 = vdwg.mxu0
  %v407 = vadd.f32 %v402, %v258
  %v408 = vpack.c.bf16 %v407, %v407
  %v409 = vld [vmem:[%s4] sm:$0xff]
  %v410 = vld [vmem:[%s4 + $0x8] sm:$0xff]
  %v411 = vld [vmem:[%s4 + $0x10] sm:$0xff]
  %v412 = vld [vmem:[%s4 + $0x18] sm:$0xff]
  %v413 = vpack.c.bf16 %v410, %v409
  %v414 = vpack.c.bf16 %v412, %v411
  %v415 = vld [vmem:[%s5] sm:$0x1]
  %v417 = vlaneseq
  %v418 = vshrl.u32 %v417, 7
  %v419 = vsub.s32 0, %v418
  %v420 = vrot.slane %v415, %v419
  %v423 = vsel %vm66, %v408, 0
  %425 = vmatprep.subr.bf16.mxu0 0
  %426 = vmatpush1.bf16.msra.mxu0 %v413
  %427 = vmatprep.subr.bf16.mxu0 0
  %428 = vmatpush1.bf16.msra.mxu0 %v414
  %429 = vmatprep.subr.bf16.mxu0 0
  %430 = vmatpush1.bf16.msra.mxu0 0
  %431 = vmatprep.subr.bf16.mxu0 0
  %432 = vmatpush1.bf16.msra.mxu0 0
  %433 = vmatprep.subr.bf16.mxu0 0
  %434 = vmatpush1.bf16.msra.mxu0 0
  %435 = vmatprep.subr.bf16.mxu0 0
  %436 = vmatpush1.bf16.msra.mxu0 0
  %437 = vmatprep.subr.bf16.mxu0 0
  %438 = vmatpush1.bf16.msra.mxu0 0
  %439 = vmatprep.subr.bf16.mxu0 0
  %440 = vmatpush1.bf16.msra.mxu0 0
  %441 = vmatprep.subr.bf16.mxu0 0
  %442 = vmatpush1.bf16.msra.mxu0 0
  %443 = vmatprep.subr.bf16.mxu0 0
  %444 = vmatpush1.bf16.msra.mxu0 0
  %445 = vmatprep.subr.bf16.mxu0 0
  %446 = vmatpush1.bf16.msra.mxu0 0
  %447 = vmatprep.subr.bf16.mxu0 0
  %448 = vmatpush1.bf16.msra.mxu0 0
  %449 = vmatprep.subr.bf16.mxu0 0
  %450 = vmatpush1.bf16.msra.mxu0 0
  %451 = vmatprep.subr.bf16.mxu0 0
  %452 = vmatpush1.bf16.msra.mxu0 0
  %453 = vmatprep.subr.bf16.mxu0 0
  %454 = vmatpush1.bf16.msra.mxu0 0
  %455 = vmatprep.subr.bf16.mxu0 0
  %456 = vmatpush1.bf16.msra.mxu0 0
  %457 = vmatprep.mubr.bf16.mxu0 0
  %458 = vmatmul.mubr.bf16.gmra.mrb[0].mxu0 %v423
  %v459 = vpop.f32.mrb[0].mxu0
  %v460 = vadd.f32 %v420, %v459
  %v461 = vpop.f32.mrb[0].mxu0
  %v462 = vpop.f32.mrb[0].mxu0
  %v463 = vpop.f32.mrb[0].mxu0
  %464 = vdwg.mxu0
  %s465 = sld [smem:[#allocation2]]
  %v466 = vstv %s465
  %v467 = vrcp.pop %v466
  %s468 = vtos %v467
  %v469 = vld [vmem:[%s6] sm:$0xff]
  %v470 = vadd.f32 %v460, %v469
  %v471 = vstv %s468
  %v472 = vmul.f32 %v470, %v471
  %474 = vrot.lane.b32.xlu0 %v472, 124
  %v475 = vpop.permute.xlu0 %474
  %v477 = vmax.f32 %v472, %v475
  %478 = vrot.lane.b32.xlu0 %v472, 120
  %v479 = vpop.permute.xlu0 %478
  %v481 = vmax.f32 %v477, %v479
  %v482 = vsub.f32 %v472, %v481
  %v483 = vmul.f32 %v482, 1.442695
  %v484 = vpow.pop %v483
  %486 = vrot.lane.b32.xlu0 %v481, 4
  %v487 = vpop.permute.xlu0 %486
  %v489 = vsub.f32 %v472, %v487
  %v490 = vmul.f32 %v489, 1.442695
  %v491 = vpow.pop %v490
  %492 = vrot.lane.b32.xlu0 %v481, 8
  %v493 = vpop.permute.xlu0 %492
  %v495 = vsub.f32 %v472, %v493
  %v496 = vmul.f32 %v495, 1.442695
  %v497 = vpow.pop %v496
  %499 = vrot.lane.b32.xlu0 %v491, 124
  %v500 = vpop.permute.xlu0 %499
  %v502 = vadd.f32 %v484, %v500
  %504 = vrot.lane.b32.xlu0 %v497, 120
  %v505 = vpop.permute.xlu0 %504
  %v507 = vadd.f32 %v502, %v505
  %v508 = vrcp.pop %v507
  %v509 = vmul.f32 1.0, %v508
  %v510 = vmul.f32 %v484, %v509
  %512 = vrot.lane.b32.xlu0 %v509, 4
  %v513 = vpop.permute.xlu0 %512
  %v515 = vmul.f32 %v491, %v513
  %516 = vrot.lane.b32.xlu0 %v509, 8
  %v517 = vpop.permute.xlu0 %516
  %v519 = vmul.f32 %v497, %v517
  %vm520 = vcmask 31744
  %v521 = vsel %vm520, %v510, %v515
  %vm522 = vcmask 64512
  %v523 = vsel %vm522, %v521, %v519
  %vm524 = vcmask 97280
  %525 = vst.msk [vmem:[%s7] sm:$0xff] %vm524, %v523
  // Predicated region
  $region30: #{generator_forward.1} parent=0 // pred_check
    _
  $region31: #{generator_forward.1} parent=0 // pred_check_branch
    %527 = sbr.rel (0) target = $region33
  $region32: #{generator_forward.1} parent=0 // pred_region
    _
  $region33: #{generator_forward.1} parent=0 // pred_fallthru
    _
  // Predicated region
  $region34: #{generator_forward.1} parent=0 // pred_check
    _
  $region35: #{generator_forward.1} parent=0 // pred_check_branch
    %529 = sbr.rel (0) target = $region37
  $region36: #{generator_forward.1} parent=0 // pred_region
    _
  $region37: #{generator_forward.1} parent=0 // pred_fallthru
    _

</llo_original>
